<compile_context>
chip_gen: v5e
topology: v5e:2x2
jax: 0.10.0
libtpu: 0.0.40
codegen_flags: <defaults>
</compile_context>

<pallas_src>
import jax
import jax.numpy as jnp
import numpy as np
from jax.experimental import pallas as pl
from jax.experimental.pallas import tpu as pltpu


def _const_index_map(ndim):
    return lambda b, _n=ndim: (0,) * _n


def multi_graph_conv_layer(adj_list, gcn_inputs, flat_params, *,
                           mem_dim, layers, heads,
                           block_b=None, mxu_dtype=jnp.bfloat16):
    head_dim = mem_dim // layers
    assert head_dim * layers == mem_dim, "mem_dim must be divisible by layers"
    B, H, N, _ = adj_list.shape
    assert H == heads

    if block_b is None:
        # Largest divisor of B keeping block rows (Bt*N) bounded -- fills the MXU
        # and amortizes per-grid-step overhead without blowing VMEM.
        block_b = 1
        for d in range(1, B + 1):
            if B % d == 0 and d * N <= 1024:
                block_b = d
    assert B % block_b == 0
    rows = block_b * N

    def kernel(*refs):
        adj_ref, x_ref = refs[0], refs[1]
        out_ref = refs[-1]
        ptr = [2]

        def take():
            r = refs[ptr[0]]
            ptr[0] += 1
            return r

        x = x_ref[...].astype(jnp.float32)                 # (Bt, N, D)
        x_mm = x.reshape(rows, mem_dim).astype(mxu_dtype)  # stacked rows for MXU
        adj_all = adj_ref[...].astype(jnp.float32)         # (Bt, H, N, N)

        acc = jnp.zeros((rows, mem_dim), jnp.float32)      # final-Linear accumulator

        for h in range(heads):
            adj = adj_all[:, h]                            # (Bt, N, N) f32
            # Hoisted, loop-invariant reciprocal of the degree normalizer.
            inv_denom = pl.reciprocal(jnp.sum(adj, axis=2, keepdims=True) + 1.0)
            adj_mm = adj.astype(mxu_dtype)

            g_mm = []                                      # per-layer gAxW (rows, head_dim)
            for l in range(layers):
                # X@W over concat([x, g_0, ..., g_{l-1}]) as per-segment matmuls.
                Wx = take()[...]                           # (mem_dim, head_dim)
                XW = jnp.dot(x_mm, Wx, preferred_element_type=jnp.float32)
                for j in range(l):
                    Wg = take()[...]                       # (head_dim, head_dim)
                    XW = XW + jnp.dot(g_mm[j], Wg,
                                      preferred_element_type=jnp.float32)
                b2 = take()[...]                           # (1, head_dim) f32 (= 2*b)

                XWb = XW.reshape(block_b, N, head_dim)
                AXW = jnp.einsum('bnm,bmd->bnd', adj_mm, XWb.astype(mxu_dtype),
                                 preferred_element_type=jnp.float32)
                g = jnp.maximum((AXW + XWb + b2) * inv_denom, 0.0)   # f32 elementwise
                # TODO(synk): dropout (self.gcn_drop) omitted -- inference mode.

                gm = g.reshape(rows, head_dim).astype(mxu_dtype)
                g_mm.append(gm)

                # Fold this layer's slice of the final Linear right away.
                Wf_seg = take()[...]                       # (head_dim, mem_dim)
                acc = acc + jnp.dot(gm, Wf_seg,
                                    preferred_element_type=jnp.float32)

        # Shared residual-x contribution (sum over heads folded at pack time) + bias.
        Wf_x = take()[...]                                 # (mem_dim, mem_dim)
        bfin = take()[...]                                 # (1, mem_dim) f32
        assert ptr[0] == len(refs) - 1
        acc = acc + jnp.dot(x_mm, Wf_x, preferred_element_type=jnp.float32) + bfin
        out_ref[...] = acc.reshape(block_b, N, mem_dim).astype(out_ref.dtype)

    in_specs = [
        pl.BlockSpec((block_b, heads, N, N), lambda b: (b, 0, 0, 0)),
        pl.BlockSpec((block_b, N, mem_dim), lambda b: (b, 0, 0)),
    ]
    # Weights: whole-array blocks with constant index maps -> DMA'd once, resident.
    for w in flat_params:
        in_specs.append(pl.BlockSpec(w.shape, _const_index_map(w.ndim)))

    return pl.pallas_call(
        kernel,
        out_shape=jax.ShapeDtypeStruct((B, N, mem_dim), gcn_inputs.dtype),
        grid_spec=pltpu.PrefetchScalarGridSpec(
            num_scalar_prefetch=0,
            grid=(B // block_b,),
            in_specs=in_specs,
            out_specs=pl.BlockSpec((block_b, N, mem_dim), lambda b: (b, 0, 0)),
        ),
        compiler_params=pltpu.CompilerParams(
            dimension_semantics=("parallel",)),
    )(adj_list, gcn_inputs, *flat_params)


def init_params(key, mem_dim, layers, heads):
    """Deterministic synthetic parameters (nn.Linear-style uniform init).
    Weights are stored already transposed: W has shape (in_dim, out_dim)."""
    head_dim = mem_dim // layers
    keys = jax.random.split(key, heads * layers * 2 + 2)
    W_list, b_list = [], []
    ki = 0
    for _i in range(heads):
        for l in range(layers):
            d_in = mem_dim + head_dim * l
            bound = 1.0 / np.sqrt(d_in)
            W_list.append(jax.random.uniform(keys[ki], (d_in, head_dim),
                                             jnp.float32, -bound, bound)); ki += 1
            b_list.append(jax.random.uniform(keys[ki], (head_dim,),
                                             jnp.float32, -bound, bound)); ki += 1
    d_in = mem_dim * heads
    bound = 1.0 / np.sqrt(d_in)
    Wf = jax.random.uniform(keys[ki], (d_in, mem_dim), jnp.float32, -bound, bound); ki += 1
    bf = jax.random.uniform(keys[ki], (mem_dim,), jnp.float32, -bound, bound)
    return W_list, b_list, Wf, bf


def pack_params(W_list, b_list, Wf, bf, *, mem_dim, layers, heads,
                mxu_dtype=jnp.bfloat16):
    """Flatten / pre-split weights for the kernel.

    Per (head, layer), in order: W_x (mem_dim, head_dim), W_g_j (head_dim, head_dim)
    for j < layer, 2*b (1, head_dim) in f32, and the layer's final-Linear segment
    (head_dim, mem_dim). Then sum_h Wf_h (mem_dim, mem_dim) for the shared
    x-residual, and the final bias (1, mem_dim) in f32. MXU operands use mxu_dtype."""
    head_dim = mem_dim // layers
    Wf = np.asarray(Wf, np.float32)                     # (mem_dim*heads, mem_dim)
    flat = []
    Wf_x_sum = np.zeros((mem_dim, mem_dim), np.float32)
    for h in range(heads):
        Wf_h = Wf[h * mem_dim:(h + 1) * mem_dim]        # (mem_dim, mem_dim)
        Wf_x_sum += Wf_h
        for l in range(layers):
            W = np.asarray(W_list[h * layers + l], np.float32)
            b = np.asarray(b_list[h * layers + l], np.float32)
            flat.append(jnp.asarray(W[:mem_dim], mxu_dtype))
            for j in range(l):
                seg = W[mem_dim + j * head_dim: mem_dim + (j + 1) * head_dim]
                flat.append(jnp.asarray(seg, mxu_dtype))
            flat.append(jnp.asarray((2.0 * b).reshape(1, head_dim), jnp.float32))
            flat.append(jnp.asarray(Wf_h[l * head_dim:(l + 1) * head_dim], mxu_dtype))
    flat.append(jnp.asarray(Wf_x_sum, mxu_dtype))
    flat.append(jnp.asarray(np.asarray(bf, np.float32).reshape(1, mem_dim)))
    return flat


def ref_forward(adj_list, x, W_list, b_list, Wf, bf, *, layers, heads):
    """Pure-JAX transcription of the PyTorch forward (dropout = identity)."""
    heads_out = []
    for i in range(heads):
        adj = adj_list[:, i]
        denom = jnp.sum(adj, axis=2, keepdims=True) + 1.0
        outputs = x
        cache = [outputs]
        outs = []
        for l in range(layers):
            idx = i * layers + l
            W = W_list[idx]
            b = b_list[idx]
            Ax = jnp.einsum('bnm,bmd->bnd', adj, outputs)
            AxW = (Ax @ W + b) + (outputs @ W + b)
            AxW = AxW / denom
            g = jax.nn.relu(AxW)
            cache.append(g)
            outputs = jnp.concatenate(cache, axis=2)
            outs.append(g)
        go = jnp.concatenate(outs, axis=2) + x
        heads_out.append(go)
    final = jnp.concatenate(heads_out, axis=2)
    return final @ Wf + bf


if __name__ == "__main__":
    B, N = 2, 8
    mem_dim, layers, heads = 32, 2, 2

    key = jax.random.PRNGKey(0)
    k1, k2, k3 = jax.random.split(key, 3)
    adj_list = (jax.random.uniform(k1, (B, heads, N, N)) > 0.5).astype(jnp.float32)
    gcn_inputs = jax.random.normal(k2, (B, N, mem_dim), jnp.float32)

    W_list, b_list, Wf, bf = init_params(k3, mem_dim, layers, heads)
    ref = ref_forward(adj_list, gcn_inputs, W_list, b_list, Wf, bf,
                      layers=layers, heads=heads)

    # Single compile / single run: default performance path (bf16 MXU operands,
    # f32 accumulation & elementwise).  Set mxu_dtype=jnp.float32 for strict numerics.
    packed = pack_params(W_list, b_list, Wf, bf, mem_dim=mem_dim,
                         layers=layers, heads=heads, mxu_dtype=jnp.bfloat16)
    out = multi_graph_conv_layer(adj_list, gcn_inputs, packed,
                                 mem_dim=mem_dim, layers=layers, heads=heads,
                                 mxu_dtype=jnp.bfloat16)
    out = jax.block_until_ready(out)

    np.testing.assert_allclose(np.asarray(out), np.asarray(ref),
                               rtol=5e-2, atol=5e-2)
    print("KERNEL_OK")
</pallas_src>

<mosaic_0001>
module attributes {stable_mosaic.version = 11 : i64} {
  func.func @kernel(%arg0: i32, %arg1: memref<2x2x8x8xf32, #tpu.memory_space<vmem>>, %arg2: memref<2x8x32xf32, #tpu.memory_space<vmem>>, %arg3: memref<32x16xbf16, #tpu.memory_space<vmem>>, %arg4: memref<1x16xf32, #tpu.memory_space<vmem>>, %arg5: memref<16x32xbf16, #tpu.memory_space<vmem>>, %arg6: memref<32x16xbf16, #tpu.memory_space<vmem>>, %arg7: memref<16x16xbf16, #tpu.memory_space<vmem>>, %arg8: memref<1x16xf32, #tpu.memory_space<vmem>>, %arg9: memref<16x32xbf16, #tpu.memory_space<vmem>>, %arg10: memref<32x16xbf16, #tpu.memory_space<vmem>>, %arg11: memref<1x16xf32, #tpu.memory_space<vmem>>, %arg12: memref<16x32xbf16, #tpu.memory_space<vmem>>, %arg13: memref<32x16xbf16, #tpu.memory_space<vmem>>, %arg14: memref<16x16xbf16, #tpu.memory_space<vmem>>, %arg15: memref<1x16xf32, #tpu.memory_space<vmem>>, %arg16: memref<16x32xbf16, #tpu.memory_space<vmem>>, %arg17: memref<32x32xbf16, #tpu.memory_space<vmem>>, %arg18: memref<1x32xf32, #tpu.memory_space<vmem>>, %arg19: memref<2x8x32xf32, #tpu.memory_space<vmem>>) attributes {dimension_semantics = [#tpu.dimension_semantics<parallel>], iteration_bounds = array<i64: 1>, scalar_prefetch = 0 : i64, scratch_operands = 0 : i64, tpu.core_type = #tpu.core_type<tc>, window_params = [{transform_indices = @transform_0, window_bounds = array<i64: 2, 2, 8, 8>}, {transform_indices = @transform_1, window_bounds = array<i64: 2, 8, 32>}, {pipeline_mode = #tpu.pipeline_mode<synchronous>, transform_indices = @transform_2, window_bounds = array<i64: 32, 16>}, {pipeline_mode = #tpu.pipeline_mode<synchronous>, transform_indices = @transform_3, window_bounds = array<i64: 1, 16>}, {pipeline_mode = #tpu.pipeline_mode<synchronous>, transform_indices = @transform_4, window_bounds = array<i64: 16, 32>}, {pipeline_mode = #tpu.pipeline_mode<synchronous>, transform_indices = @transform_5, window_bounds = array<i64: 32, 16>}, {pipeline_mode = #tpu.pipeline_mode<synchronous>, transform_indices = @transform_6, window_bounds = array<i64: 16, 16>}, {pipeline_mode = #tpu.pipeline_mode<synchronous>, transform_indices = @transform_7, window_bounds = array<i64: 1, 16>}, {pipeline_mode = #tpu.pipeline_mode<synchronous>, transform_indices = @transform_8, window_bounds = array<i64: 16, 32>}, {pipeline_mode = #tpu.pipeline_mode<synchronous>, transform_indices = @transform_9, window_bounds = array<i64: 32, 16>}, {pipeline_mode = #tpu.pipeline_mode<synchronous>, transform_indices = @transform_10, window_bounds = array<i64: 1, 16>}, {pipeline_mode = #tpu.pipeline_mode<synchronous>, transform_indices = @transform_11, window_bounds = array<i64: 16, 32>}, {pipeline_mode = #tpu.pipeline_mode<synchronous>, transform_indices = @transform_12, window_bounds = array<i64: 32, 16>}, {pipeline_mode = #tpu.pipeline_mode<synchronous>, transform_indices = @transform_13, window_bounds = array<i64: 16, 16>}, {pipeline_mode = #tpu.pipeline_mode<synchronous>, transform_indices = @transform_14, window_bounds = array<i64: 1, 16>}, {pipeline_mode = #tpu.pipeline_mode<synchronous>, transform_indices = @transform_15, window_bounds = array<i64: 16, 32>}, {pipeline_mode = #tpu.pipeline_mode<synchronous>, transform_indices = @transform_16, window_bounds = array<i64: 32, 32>}, {pipeline_mode = #tpu.pipeline_mode<synchronous>, transform_indices = @transform_17, window_bounds = array<i64: 1, 32>}, {transform_indices = @transform_18, window_bounds = array<i64: 2, 8, 32>}]} {
    %c0 = arith.constant 0 : index
    %c0_0 = arith.constant 0 : index
    %c0_1 = arith.constant 0 : index
    %0 = vector.load %arg2[%c0, %c0_0, %c0_1] : memref<2x8x32xf32, #tpu.memory_space<vmem>>, vector<2x8x32xf32>
    %1 = vector.shape_cast %0 : vector<2x8x32xf32> to vector<16x32xf32>
    %2 = arith.truncf %1 : vector<16x32xf32> to vector<16x32xbf16>
    %c0_2 = arith.constant 0 : index
    %c0_3 = arith.constant 0 : index
    %c0_4 = arith.constant 0 : index
    %c0_5 = arith.constant 0 : index
    %3 = vector.load %arg1[%c0_2, %c0_3, %c0_4, %c0_5] : memref<2x2x8x8xf32, #tpu.memory_space<vmem>>, vector<2x2x8x8xf32>
    %cst = arith.constant 0.000000e+00 : f32
    %4 = vector.broadcast %cst : f32 to vector<16x32xf32>
    %5 = vector.extract_strided_slice %3 {offsets = [0, 0, 0, 0], sizes = [2, 1, 8, 8], strides = [1, 1, 1, 1]} : vector<2x2x8x8xf32> to vector<2x1x8x8xf32>
    %6 = vector.shape_cast %5 : vector<2x1x8x8xf32> to vector<2x8x8xf32>
    %cst_6 = arith.constant dense<0.000000e+00> : vector<2x8xf32>
    %7 = vector.multi_reduction <add>, %6, %cst_6 [2] : vector<2x8x8xf32> to vector<2x8xf32>
    %8 = vector.shape_cast %7 : vector<2x8xf32> to vector<2x8x1xf32>
    %cst_7 = arith.constant 1.000000e+00 : f32
    %9 = vector.broadcast %cst_7 : f32 to vector<2x8x1xf32>
    %10 = arith.addf %8, %9 : vector<2x8x1xf32>
    %11 = tpu.reciprocal %10 : vector<2x8x1xf32> -> vector<2x8x1xf32>
    %12 = arith.truncf %6 : vector<2x8x8xf32> to vector<2x8x8xbf16>
    %c0_8 = arith.constant 0 : index
    %c0_9 = arith.constant 0 : index
    %13 = vector.load %arg3[%c0_8, %c0_9] : memref<32x16xbf16, #tpu.memory_space<vmem>>, vector<32x16xbf16>
    %cst_10 = arith.constant dense<0.000000e+00> : vector<16x16xf32>
    %14 = tpu.matmul %2, %13, %cst_10 {dimension_numbers = #tpu.dot_dimension_numbers<[1], [0], [0], [1], [0, 0, 1, 1], [], []>} : vector<16x32xbf16>, vector<32x16xbf16>, vector<16x16xf32> -> vector<16x16xf32>
    %c0_11 = arith.constant 0 : index
    %c0_12 = arith.constant 0 : index
    %15 = vector.load %arg4[%c0_11, %c0_12] : memref<1x16xf32, #tpu.memory_space<vmem>>, vector<1x16xf32>
    %16 = vector.shape_cast %14 : vector<16x16xf32> to vector<2x8x16xf32>
    %17 = arith.truncf %16 : vector<2x8x16xf32> to vector<2x8x16xbf16>
    "tpu.trace_start"() <{level = 10 : i32, message = "bnm,bmd->bnd"}> : () -> ()
    %cst_13 = arith.constant dense<0.000000e+00> : vector<2x8x16xf32>
    %18 = tpu.matmul %12, %17, %cst_13 {dimension_numbers = #tpu.dot_dimension_numbers<[2], [1], [1], [2], [0, 0, 0, 1, 1, 2], [0], [0]>} : vector<2x8x8xbf16>, vector<2x8x16xbf16>, vector<2x8x16xf32> -> vector<2x8x16xf32>
    "tpu.trace_stop"() : () -> ()
    %19 = arith.addf %18, %16 : vector<2x8x16xf32>
    %20 = vector.shape_cast %15 : vector<1x16xf32> to vector<1x1x16xf32>
    %21 = vector.broadcast %20 : vector<1x1x16xf32> to vector<2x8x16xf32>
    %22 = arith.addf %19, %21 : vector<2x8x16xf32>
    %23 = vector.broadcast %11 : vector<2x8x1xf32> to vector<2x8x16xf32>
    %24 = arith.mulf %22, %23 : vector<2x8x16xf32>
    %cst_14 = arith.constant 0.000000e+00 : f32
    %25 = vector.broadcast %cst_14 : f32 to vector<2x8x16xf32>
    %26 = arith.maximumf %24, %25 : vector<2x8x16xf32>
    %27 = vector.shape_cast %26 : vector<2x8x16xf32> to vector<16x16xf32>
    %28 = arith.truncf %27 : vector<16x16xf32> to vector<16x16xbf16>
    %c0_15 = arith.constant 0 : index
    %c0_16 = arith.constant 0 : index
    %29 = vector.load %arg5[%c0_15, %c0_16] : memref<16x32xbf16, #tpu.memory_space<vmem>>, vector<16x32xbf16>
    %cst_17 = arith.constant dense<0.000000e+00> : vector<16x32xf32>
    %30 = tpu.matmul %28, %29, %cst_17 {dimension_numbers = #tpu.dot_dimension_numbers<[1], [0], [0], [1], [0, 0, 1, 1], [], []>} : vector<16x16xbf16>, vector<16x32xbf16>, vector<16x32xf32> -> vector<16x32xf32>
    %31 = arith.addf %4, %30 : vector<16x32xf32>
    %c0_18 = arith.constant 0 : index
    %c0_19 = arith.constant 0 : index
    %32 = vector.load %arg6[%c0_18, %c0_19] : memref<32x16xbf16, #tpu.memory_space<vmem>>, vector<32x16xbf16>
    %cst_20 = arith.constant dense<0.000000e+00> : vector<16x16xf32>
    %33 = tpu.matmul %2, %32, %cst_20 {dimension_numbers = #tpu.dot_dimension_numbers<[1], [0], [0], [1], [0, 0, 1, 1], [], []>} : vector<16x32xbf16>, vector<32x16xbf16>, vector<16x16xf32> -> vector<16x16xf32>
    %c0_21 = arith.constant 0 : index
    %c0_22 = arith.constant 0 : index
    %34 = vector.load %arg7[%c0_21, %c0_22] : memref<16x16xbf16, #tpu.memory_space<vmem>>, vector<16x16xbf16>
    %cst_23 = arith.constant dense<0.000000e+00> : vector<16x16xf32>
    %35 = tpu.matmul %28, %34, %cst_23 {dimension_numbers = #tpu.dot_dimension_numbers<[1], [0], [0], [1], [0, 0, 1, 1], [], []>} : vector<16x16xbf16>, vector<16x16xbf16>, vector<16x16xf32> -> vector<16x16xf32>
    %36 = arith.addf %33, %35 : vector<16x16xf32>
    %c0_24 = arith.constant 0 : index
    %c0_25 = arith.constant 0 : index
    %37 = vector.load %arg8[%c0_24, %c0_25] : memref<1x16xf32, #tpu.memory_space<vmem>>, vector<1x16xf32>
    %38 = vector.shape_cast %36 : vector<16x16xf32> to vector<2x8x16xf32>
    %39 = arith.truncf %38 : vector<2x8x16xf32> to vector<2x8x16xbf16>
    "tpu.trace_start"() <{level = 10 : i32, message = "bnm,bmd->bnd"}> : () -> ()
    %cst_26 = arith.constant dense<0.000000e+00> : vector<2x8x16xf32>
    %40 = tpu.matmul %12, %39, %cst_26 {dimension_numbers = #tpu.dot_dimension_numbers<[2], [1], [1], [2], [0, 0, 0, 1, 1, 2], [0], [0]>} : vector<2x8x8xbf16>, vector<2x8x16xbf16>, vector<2x8x16xf32> -> vector<2x8x16xf32>
    "tpu.trace_stop"() : () -> ()
    %41 = arith.addf %40, %38 : vector<2x8x16xf32>
    %42 = vector.shape_cast %37 : vector<1x16xf32> to vector<1x1x16xf32>
    %43 = vector.broadcast %42 : vector<1x1x16xf32> to vector<2x8x16xf32>
    %44 = arith.addf %41, %43 : vector<2x8x16xf32>
    %45 = vector.broadcast %11 : vector<2x8x1xf32> to vector<2x8x16xf32>
    %46 = arith.mulf %44, %45 : vector<2x8x16xf32>
    %cst_27 = arith.constant 0.000000e+00 : f32
    %47 = vector.broadcast %cst_27 : f32 to vector<2x8x16xf32>
    %48 = arith.maximumf %46, %47 : vector<2x8x16xf32>
    %49 = vector.shape_cast %48 : vector<2x8x16xf32> to vector<16x16xf32>
    %50 = arith.truncf %49 : vector<16x16xf32> to vector<16x16xbf16>
    %c0_28 = arith.constant 0 : index
    %c0_29 = arith.constant 0 : index
    %51 = vector.load %arg9[%c0_28, %c0_29] : memref<16x32xbf16, #tpu.memory_space<vmem>>, vector<16x32xbf16>
    %cst_30 = arith.constant dense<0.000000e+00> : vector<16x32xf32>
    %52 = tpu.matmul %50, %51, %cst_30 {dimension_numbers = #tpu.dot_dimension_numbers<[1], [0], [0], [1], [0, 0, 1, 1], [], []>} : vector<16x16xbf16>, vector<16x32xbf16>, vector<16x32xf32> -> vector<16x32xf32>
    %53 = arith.addf %31, %52 : vector<16x32xf32>
    %54 = vector.extract_strided_slice %3 {offsets = [0, 1, 0, 0], sizes = [2, 1, 8, 8], strides = [1, 1, 1, 1]} : vector<2x2x8x8xf32> to vector<2x1x8x8xf32>
    %55 = vector.shape_cast %54 : vector<2x1x8x8xf32> to vector<2x8x8xf32>
    %cst_31 = arith.constant dense<0.000000e+00> : vector<2x8xf32>
    %56 = vector.multi_reduction <add>, %55, %cst_31 [2] : vector<2x8x8xf32> to vector<2x8xf32>
    %57 = vector.shape_cast %56 : vector<2x8xf32> to vector<2x8x1xf32>
    %cst_32 = arith.constant 1.000000e+00 : f32
    %58 = vector.broadcast %cst_32 : f32 to vector<2x8x1xf32>
    %59 = arith.addf %57, %58 : vector<2x8x1xf32>
    %60 = tpu.reciprocal %59 : vector<2x8x1xf32> -> vector<2x8x1xf32>
    %61 = arith.truncf %55 : vector<2x8x8xf32> to vector<2x8x8xbf16>
    %c0_33 = arith.constant 0 : index
    %c0_34 = arith.constant 0 : index
    %62 = vector.load %arg10[%c0_33, %c0_34] : memref<32x16xbf16, #tpu.memory_space<vmem>>, vector<32x16xbf16>
    %cst_35 = arith.constant dense<0.000000e+00> : vector<16x16xf32>
    %63 = tpu.matmul %2, %62, %cst_35 {dimension_numbers = #tpu.dot_dimension_numbers<[1], [0], [0], [1], [0, 0, 1, 1], [], []>} : vector<16x32xbf16>, vector<32x16xbf16>, vector<16x16xf32> -> vector<16x16xf32>
    %c0_36 = arith.constant 0 : index
    %c0_37 = arith.constant 0 : index
    %64 = vector.load %arg11[%c0_36, %c0_37] : memref<1x16xf32, #tpu.memory_space<vmem>>, vector<1x16xf32>
    %65 = vector.shape_cast %63 : vector<16x16xf32> to vector<2x8x16xf32>
    %66 = arith.truncf %65 : vector<2x8x16xf32> to vector<2x8x16xbf16>
    "tpu.trace_start"() <{level = 10 : i32, message = "bnm,bmd->bnd"}> : () -> ()
    %cst_38 = arith.constant dense<0.000000e+00> : vector<2x8x16xf32>
    %67 = tpu.matmul %61, %66, %cst_38 {dimension_numbers = #tpu.dot_dimension_numbers<[2], [1], [1], [2], [0, 0, 0, 1, 1, 2], [0], [0]>} : vector<2x8x8xbf16>, vector<2x8x16xbf16>, vector<2x8x16xf32> -> vector<2x8x16xf32>
    "tpu.trace_stop"() : () -> ()
    %68 = arith.addf %67, %65 : vector<2x8x16xf32>
    %69 = vector.shape_cast %64 : vector<1x16xf32> to vector<1x1x16xf32>
    %70 = vector.broadcast %69 : vector<1x1x16xf32> to vector<2x8x16xf32>
    %71 = arith.addf %68, %70 : vector<2x8x16xf32>
    %72 = vector.broadcast %60 : vector<2x8x1xf32> to vector<2x8x16xf32>
    %73 = arith.mulf %71, %72 : vector<2x8x16xf32>
    %cst_39 = arith.constant 0.000000e+00 : f32
    %74 = vector.broadcast %cst_39 : f32 to vector<2x8x16xf32>
    %75 = arith.maximumf %73, %74 : vector<2x8x16xf32>
    %76 = vector.shape_cast %75 : vector<2x8x16xf32> to vector<16x16xf32>
    %77 = arith.truncf %76 : vector<16x16xf32> to vector<16x16xbf16>
    %c0_40 = arith.constant 0 : index
    %c0_41 = arith.constant 0 : index
    %78 = vector.load %arg12[%c0_40, %c0_41] : memref<16x32xbf16, #tpu.memory_space<vmem>>, vector<16x32xbf16>
    %cst_42 = arith.constant dense<0.000000e+00> : vector<16x32xf32>
    %79 = tpu.matmul %77, %78, %cst_42 {dimension_numbers = #tpu.dot_dimension_numbers<[1], [0], [0], [1], [0, 0, 1, 1], [], []>} : vector<16x16xbf16>, vector<16x32xbf16>, vector<16x32xf32> -> vector<16x32xf32>
    %80 = arith.addf %53, %79 : vector<16x32xf32>
    %c0_43 = arith.constant 0 : index
    %c0_44 = arith.constant 0 : index
    %81 = vector.load %arg13[%c0_43, %c0_44] : memref<32x16xbf16, #tpu.memory_space<vmem>>, vector<32x16xbf16>
    %cst_45 = arith.constant dense<0.000000e+00> : vector<16x16xf32>
    %82 = tpu.matmul %2, %81, %cst_45 {dimension_numbers = #tpu.dot_dimension_numbers<[1], [0], [0], [1], [0, 0, 1, 1], [], []>} : vector<16x32xbf16>, vector<32x16xbf16>, vector<16x16xf32> -> vector<16x16xf32>
    %c0_46 = arith.constant 0 : index
    %c0_47 = arith.constant 0 : index
    %83 = vector.load %arg14[%c0_46, %c0_47] : memref<16x16xbf16, #tpu.memory_space<vmem>>, vector<16x16xbf16>
    %cst_48 = arith.constant dense<0.000000e+00> : vector<16x16xf32>
    %84 = tpu.matmul %77, %83, %cst_48 {dimension_numbers = #tpu.dot_dimension_numbers<[1], [0], [0], [1], [0, 0, 1, 1], [], []>} : vector<16x16xbf16>, vector<16x16xbf16>, vector<16x16xf32> -> vector<16x16xf32>
    %85 = arith.addf %82, %84 : vector<16x16xf32>
    %c0_49 = arith.constant 0 : index
    %c0_50 = arith.constant 0 : index
    %86 = vector.load %arg15[%c0_49, %c0_50] : memref<1x16xf32, #tpu.memory_space<vmem>>, vector<1x16xf32>
    %87 = vector.shape_cast %85 : vector<16x16xf32> to vector<2x8x16xf32>
    %88 = arith.truncf %87 : vector<2x8x16xf32> to vector<2x8x16xbf16>
    "tpu.trace_start"() <{level = 10 : i32, message = "bnm,bmd->bnd"}> : () -> ()
    %cst_51 = arith.constant dense<0.000000e+00> : vector<2x8x16xf32>
    %89 = tpu.matmul %61, %88, %cst_51 {dimension_numbers = #tpu.dot_dimension_numbers<[2], [1], [1], [2], [0, 0, 0, 1, 1, 2], [0], [0]>} : vector<2x8x8xbf16>, vector<2x8x16xbf16>, vector<2x8x16xf32> -> vector<2x8x16xf32>
    "tpu.trace_stop"() : () -> ()
    %90 = arith.addf %89, %87 : vector<2x8x16xf32>
    %91 = vector.shape_cast %86 : vector<1x16xf32> to vector<1x1x16xf32>
    %92 = vector.broadcast %91 : vector<1x1x16xf32> to vector<2x8x16xf32>
    %93 = arith.addf %90, %92 : vector<2x8x16xf32>
    %94 = vector.broadcast %60 : vector<2x8x1xf32> to vector<2x8x16xf32>
    %95 = arith.mulf %93, %94 : vector<2x8x16xf32>
    %cst_52 = arith.constant 0.000000e+00 : f32
    %96 = vector.broadcast %cst_52 : f32 to vector<2x8x16xf32>
    %97 = arith.maximumf %95, %96 : vector<2x8x16xf32>
    %98 = vector.shape_cast %97 : vector<2x8x16xf32> to vector<16x16xf32>
    %99 = arith.truncf %98 : vector<16x16xf32> to vector<16x16xbf16>
    %c0_53 = arith.constant 0 : index
    %c0_54 = arith.constant 0 : index
    %100 = vector.load %arg16[%c0_53, %c0_54] : memref<16x32xbf16, #tpu.memory_space<vmem>>, vector<16x32xbf16>
    %cst_55 = arith.constant dense<0.000000e+00> : vector<16x32xf32>
    %101 = tpu.matmul %99, %100, %cst_55 {dimension_numbers = #tpu.dot_dimension_numbers<[1], [0], [0], [1], [0, 0, 1, 1], [], []>} : vector<16x16xbf16>, vector<16x32xbf16>, vector<16x32xf32> -> vector<16x32xf32>
    %102 = arith.addf %80, %101 : vector<16x32xf32>
    %c0_56 = arith.constant 0 : index
    %c0_57 = arith.constant 0 : index
    %103 = vector.load %arg17[%c0_56, %c0_57] : memref<32x32xbf16, #tpu.memory_space<vmem>>, vector<32x32xbf16>
    %c0_58 = arith.constant 0 : index
    %c0_59 = arith.constant 0 : index
    %104 = vector.load %arg18[%c0_58, %c0_59] : memref<1x32xf32, #tpu.memory_space<vmem>>, vector<1x32xf32>
    %cst_60 = arith.constant dense<0.000000e+00> : vector<16x32xf32>
    %105 = tpu.matmul %2, %103, %cst_60 {dimension_numbers = #tpu.dot_dimension_numbers<[1], [0], [0], [1], [0, 0, 1, 1], [], []>} : vector<16x32xbf16>, vector<32x32xbf16>, vector<16x32xf32> -> vector<16x32xf32>
    %106 = arith.addf %102, %105 : vector<16x32xf32>
    %107 = vector.broadcast %104 : vector<1x32xf32> to vector<16x32xf32>
    %108 = arith.addf %106, %107 : vector<16x32xf32>
    %109 = vector.shape_cast %108 : vector<16x32xf32> to vector<2x8x32xf32>
    %c0_61 = arith.constant 0 : index
    %c0_62 = arith.constant 0 : index
    %c0_63 = arith.constant 0 : index
    %110 = vector.load %arg19[%c0_61, %c0_62, %c0_63] : memref<2x8x32xf32, #tpu.memory_space<vmem>>, vector<2x8x32xf32>
    tpu.vector_store %arg19[%c0_61, %c0_62, %c0_63], %109 {strides = array<i32>} : memref<2x8x32xf32, #tpu.memory_space<vmem>>, vector<2x8x32xf32>,
    return
  }
  func.func @transform_0(%arg0: i32) -> (i32, i32, i32, i32) {
    %c0_i32 = arith.constant 0 : i32
    %c0_i32_0 = arith.constant 0 : i32
    %c0_i32_1 = arith.constant 0 : i32
    %c0_i32_2 = arith.constant 0 : i32
    return %arg0, %c0_i32, %c0_i32_0, %c0_i32_1 : i32, i32, i32, i32
  }
  func.func @transform_1(%arg0: i32) -> (i32, i32, i32) {
    %c0_i32 = arith.constant 0 : i32
    %c0_i32_0 = arith.constant 0 : i32
    %c0_i32_1 = arith.constant 0 : i32
    return %arg0, %c0_i32, %c0_i32_0 : i32, i32, i32
  }
  func.func @transform_2(%arg0: i32) -> (i32, i32) {
    %c0_i32 = arith.constant 0 : i32
    %c0_i32_0 = arith.constant 0 : i32
    %c0_i32_1 = arith.constant 0 : i32
    return %c0_i32, %c0_i32_0 : i32, i32
  }
  func.func @transform_3(%arg0: i32) -> (i32, i32) {
    %c0_i32 = arith.constant 0 : i32
    %c0_i32_0 = arith.constant 0 : i32
    %c0_i32_1 = arith.constant 0 : i32
    return %c0_i32, %c0_i32_0 : i32, i32
  }
  func.func @transform_4(%arg0: i32) -> (i32, i32) {
    %c0_i32 = arith.constant 0 : i32
    %c0_i32_0 = arith.constant 0 : i32
    %c0_i32_1 = arith.constant 0 : i32
    return %c0_i32, %c0_i32_0 : i32, i32
  }
  func.func @transform_5(%arg0: i32) -> (i32, i32) {
    %c0_i32 = arith.constant 0 : i32
    %c0_i32_0 = arith.constant 0 : i32
    %c0_i32_1 = arith.constant 0 : i32
    return %c0_i32, %c0_i32_0 : i32, i32
  }
  func.func @transform_6(%arg0: i32) -> (i32, i32) {
    %c0_i32 = arith.constant 0 : i32
    %c0_i32_0 = arith.constant 0 : i32
    %c0_i32_1 = arith.constant 0 : i32
    return %c0_i32, %c0_i32_0 : i32, i32
  }
  func.func @transform_7(%arg0: i32) -> (i32, i32) {
    %c0_i32 = arith.constant 0 : i32
    %c0_i32_0 = arith.constant 0 : i32
    %c0_i32_1 = arith.constant 0 : i32
    return %c0_i32, %c0_i32_0 : i32, i32
  }
  func.func @transform_8(%arg0: i32) -> (i32, i32) {
    %c0_i32 = arith.constant 0 : i32
    %c0_i32_0 = arith.constant 0 : i32
    %c0_i32_1 = arith.constant 0 : i32
    return %c0_i32, %c0_i32_0 : i32, i32
  }
  func.func @transform_9(%arg0: i32) -> (i32, i32) {
    %c0_i32 = arith.constant 0 : i32
    %c0_i32_0 = arith.constant 0 : i32
    %c0_i32_1 = arith.constant 0 : i32
    return %c0_i32, %c0_i32_0 : i32, i32
  }
  func.func @transform_10(%arg0: i32) -> (i32, i32) {
    %c0_i32 = arith.constant 0 : i32
    %c0_i32_0 = arith.constant 0 : i32
    %c0_i32_1 = arith.constant 0 : i32
    return %c0_i32, %c0_i32_0 : i32, i32
  }
  func.func @transform_11(%arg0: i32) -> (i32, i32) {
    %c0_i32 = arith.constant 0 : i32
    %c0_i32_0 = arith.constant 0 : i32
    %c0_i32_1 = arith.constant 0 : i32
    return %c0_i32, %c0_i32_0 : i32, i32
  }
  func.func @transform_12(%arg0: i32) -> (i32, i32) {
    %c0_i32 = arith.constant 0 : i32
    %c0_i32_0 = arith.constant 0 : i32
    %c0_i32_1 = arith.constant 0 : i32
    return %c0_i32, %c0_i32_0 : i32, i32
  }
  func.func @transform_13(%arg0: i32) -> (i32, i32) {
    %c0_i32 = arith.constant 0 : i32
    %c0_i32_0 = arith.constant 0 : i32
    %c0_i32_1 = arith.constant 0 : i32
    return %c0_i32, %c0_i32_0 : i32, i32
  }
  func.func @transform_14(%arg0: i32) -> (i32, i32) {
    %c0_i32 = arith.constant 0 : i32
    %c0_i32_0 = arith.constant 0 : i32
    %c0_i32_1 = arith.constant 0 : i32
    return %c0_i32, %c0_i32_0 : i32, i32
  }
  func.func @transform_15(%arg0: i32) -> (i32, i32) {
    %c0_i32 = arith.constant 0 : i32
    %c0_i32_0 = arith.constant 0 : i32
    %c0_i32_1 = arith.constant 0 : i32
    return %c0_i32, %c0_i32_0 : i32, i32
  }
  func.func @transform_16(%arg0: i32) -> (i32, i32) {
    %c0_i32 = arith.constant 0 : i32
    %c0_i32_0 = arith.constant 0 : i32
    %c0_i32_1 = arith.constant 0 : i32
    return %c0_i32, %c0_i32_0 : i32, i32
  }
  func.func @transform_17(%arg0: i32) -> (i32, i32) {
    %c0_i32 = arith.constant 0 : i32
    %c0_i32_0 = arith.constant 0 : i32
    %c0_i32_1 = arith.constant 0 : i32
    return %c0_i32, %c0_i32_0 : i32, i32
  }
  func.func @transform_18(%arg0: i32) -> (i32, i32, i32) {
    %c0_i32 = arith.constant 0 : i32
    %c0_i32_0 = arith.constant 0 : i32
    %c0_i32_1 = arith.constant 0 : i32
    return %arg0, %c0_i32, %c0_i32_0 : i32, i32, i32
  }
}

</mosaic_0001>

<llo_original>
// kernel: tpu_custom_call.1
$region0: #{tpu_custom_call.1}
  #allocation0 [shape = 'u32[]', space=smem, size = 0x4, offset = 0x4, fixed_abs, tag = 'smem constant byte address 0x4 - core index']
  #allocation1 [shape = 'u32[72,128]{1,0:T(1,128)}', space=vmem, size = 0x9000, scoped, tag = 'internal scratch']
  %s0 = inlined_call_operand.vmem [shape: f32[2,2,8,8], index: 0, kind: input, shape index: {}]
  %s1 = inlined_call_operand.vmem [shape: f32[2,8,32], index: 1, kind: input, shape index: {}]
  %s2 = inlined_call_operand.vmem [shape: bf16[32,16], index: 2, kind: input, shape index: {}]
  %s3 = inlined_call_operand.vmem [shape: f32[1,16], index: 3, kind: input, shape index: {}]
  %s4 = inlined_call_operand.vmem [shape: bf16[16,32], index: 4, kind: input, shape index: {}]
  %s5 = inlined_call_operand.vmem [shape: bf16[32,16], index: 5, kind: input, shape index: {}]
  %s6 = inlined_call_operand.hbm [shape: bf16[16,16], index: 6, kind: input, shape index: {}]
  %s7 = inlined_call_operand.hbm [shape: f32[1,16], index: 7, kind: input, shape index: {}]
  %s8 = inlined_call_operand.hbm [shape: bf16[16,32], index: 8, kind: input, shape index: {}]
  %s9 = inlined_call_operand.vmem [shape: bf16[32,16], index: 9, kind: input, shape index: {}]
  %s10 = inlined_call_operand.hbm [shape: f32[1,16], index: 10, kind: input, shape index: {}]
  %s11 = inlined_call_operand.vmem [shape: bf16[16,32], index: 11, kind: input, shape index: {}]
  %s12 = inlined_call_operand.vmem [shape: bf16[32,16], index: 12, kind: input, shape index: {}]
  %s13 = inlined_call_operand.hbm [shape: bf16[16,16], index: 13, kind: input, shape index: {}]
  %s14 = inlined_call_operand.vmem [shape: f32[1,16], index: 14, kind: input, shape index: {}]
  %s15 = inlined_call_operand.hbm [shape: bf16[16,32], index: 15, kind: input, shape index: {}]
  %s16 = inlined_call_operand.vmem [shape: bf16[32,32], index: 16, kind: input, shape index: {}]
  %s17 = inlined_call_operand.vmem [shape: f32[1,32], index: 17, kind: input, shape index: {}]
  %s18 = inlined_call_operand.hbm [shape: f32[2,8,32], index: 18, kind: output, shape index: {}]
  %s19 = sld [smem:[#allocation0]]
  $region106: #{tpu_custom_call.1} parent=0
    _
  %s21 = ssub.s32 1, %s19
  %s22 = scalar_select 0, %s21, %s19
  $region1: #{tpu_custom_call.1} parent=0
    #allocation2 [shape = 'u8[4096]{0}', space=vmem, size = 0x1000, scoped, tag = 'input window, operand 6, single buffered']
    #allocation3 [shape = 's32[1]{0}', space=sflag, size = 0x4, scoped, tag = 'scoped memory for tpu_custom_call.1']
    #allocation4 [shape = 's32[1]{0}', space=sflag, size = 0x4, scoped, tag = 'scoped memory for tpu_custom_call.1']
    #allocation5 [shape = 'u8[512]{0}', space=vmem, size = 0x400, scoped, tag = 'input window, operand 7, single buffered']
    #allocation6 [shape = 's32[1]{0}', space=sflag, size = 0x4, scoped, tag = 'scoped memory for tpu_custom_call.1']
    #allocation7 [shape = 'u8[4096]{0}', space=vmem, size = 0x1000, scoped, tag = 'input window, operand 8, single buffered']
    #allocation8 [shape = 'u8[512]{0}', space=vmem, size = 0x400, scoped, tag = 'input window, operand 10, single buffered']
    #allocation9 [shape = 's32[1]{0}', space=sflag, size = 0x4, scoped, tag = 'scoped memory for tpu_custom_call.1']
    #allocation10 [shape = 'u8[4096]{0}', space=vmem, size = 0x1000, scoped, tag = 'input window, operand 13, single buffered']
    #allocation11 [shape = 'u8[4096]{0}', space=vmem, size = 0x1000, scoped, tag = 'input window, operand 15, single buffered']
    #allocation12 [shape = 's32[1]{0}', space=sflag, size = 0x4, scoped, tag = 'scoped memory for tpu_custom_call.1']
    #allocation13 [shape = 'u8[8192]{0}', space=vmem, size = 0x2000, scoped, tag = 'output window, operand 0, single buffered']
    %23 = vsyncpa [#allocation3], 0
    %24 = vsyncpa [#allocation6], 0
    %25 = vsyncpa [#allocation9], 0
    %26 = vsyncpa [#allocation12], 0
    %27 = vsyncpa [#allocation4], 0
    // Predicated region
    $region2: #{tpu_custom_call.1} parent=1 // pred_check
      _
    $region3: #{tpu_custom_call.1} parent=1 // pred_check_branch
      %29 = sbr.rel (0) target = $region5
    $region4: #{tpu_custom_call.1} parent=1 // pred_region
      _
    $region5: #{tpu_custom_call.1} parent=1 // pred_fallthru
      _
    // Predicated region
    $region6: #{tpu_custom_call.1} parent=1 // pred_check
      _
    $region7: #{tpu_custom_call.1} parent=1 // pred_check_branch
      %31 = sbr.rel (0) target = $region9
    $region8: #{tpu_custom_call.1} parent=1 // pred_region
      _
    $region9: #{tpu_custom_call.1} parent=1 // pred_fallthru
      _
    // Predicated region
    $region10: #{tpu_custom_call.1} parent=1 // pred_check
      _
    $region11: #{tpu_custom_call.1} parent=1 // pred_check_branch
      %33 = sbr.rel (0) target = $region13
    $region12: #{tpu_custom_call.1} parent=1 // pred_region
      _
    $region13: #{tpu_custom_call.1} parent=1 // pred_fallthru
      _
    // Predicated region
    $region14: #{tpu_custom_call.1} parent=1 // pred_check
      _
    $region15: #{tpu_custom_call.1} parent=1 // pred_check_branch
      %35 = sbr.rel (0) target = $region17
    $region16: #{tpu_custom_call.1} parent=1 // pred_region
      _
    $region17: #{tpu_custom_call.1} parent=1 // pred_fallthru
      _
    // Predicated region
    $region18: #{tpu_custom_call.1} parent=1 // pred_check
      _
    $region19: #{tpu_custom_call.1} parent=1 // pred_check_branch
      %37 = sbr.rel (0) target = $region21
    $region20: #{tpu_custom_call.1} parent=1 // pred_region
      _
    $region21: #{tpu_custom_call.1} parent=1 // pred_fallthru
      _
    // Predicated region
    $region22: #{tpu_custom_call.1} parent=1 // pred_check
      _
    $region23: #{tpu_custom_call.1} parent=1 // pred_check_branch
      %39 = sbr.rel (0) target = $region25
    $region24: #{tpu_custom_call.1} parent=1 // pred_region
      _
    $region25: #{tpu_custom_call.1} parent=1 // pred_fallthru
      _
    // Predicated region
    $region26: #{tpu_custom_call.1} parent=1 // pred_check
      _
    $region27: #{tpu_custom_call.1} parent=1 // pred_check_branch
      %41 = sbr.rel (0) target = $region29
    $region28: #{tpu_custom_call.1} parent=1 // pred_region
      %43 = vsyncadd [#allocation3], 0
      %s44 = sshll.u32 %s6, 4
      %s45 = int_to_ptr.hbm [resolvable:$true] %s44
      %s46 = sshll.u32 [#allocation2], 4
      %s47 = int_to_ptr.vmem [resolvable:$true] %s46
      %52 = dma.hbm_to_vmem [thread:$0]  %s45, 128, %s47, [#allocation3], 64, 64, 4
    $region29: #{tpu_custom_call.1} parent=1 // pred_fallthru
      _
    // Predicated region
    $region30: #{tpu_custom_call.1} parent=1 // pred_check
      _
    $region31: #{tpu_custom_call.1} parent=1 // pred_check_branch
      %54 = sbr.rel (0) target = $region33
    $region32: #{tpu_custom_call.1} parent=1 // pred_region
      %56 = vsyncadd [#allocation6], 0
      %s58 = sshll.u32 %s7, 4
      %s59 = int_to_ptr.hbm [resolvable:$true] %s58
      %s60 = sshll.u32 [#allocation5], 4
      %s61 = int_to_ptr.vmem [resolvable:$true] %s60
      %63 = dma.hbm_to_vmem [thread:$0]  %s59, 16, %s61, [#allocation6]
    $region33: #{tpu_custom_call.1} parent=1 // pred_fallthru
      _
    // Predicated region
    $region34: #{tpu_custom_call.1} parent=1 // pred_check
      _
    $region35: #{tpu_custom_call.1} parent=1 // pred_check_branch
      %65 = sbr.rel (0) target = $region37
    $region36: #{tpu_custom_call.1} parent=1 // pred_region
      %67 = vsyncadd [#allocation6], 0
      %s68 = sshll.u32 %s8, 4
      %s69 = int_to_ptr.hbm [resolvable:$true] %s68
      %s70 = sshll.u32 [#allocation7], 4
      %s71 = int_to_ptr.vmem [resolvable:$true] %s70
      %76 = dma.hbm_to_vmem [thread:$0]  %s69, 128, %s71, [#allocation6], 64, 64, 4
    $region37: #{tpu_custom_call.1} parent=1 // pred_fallthru
      _
    // Predicated region
    $region38: #{tpu_custom_call.1} parent=1 // pred_check
      _
    $region39: #{tpu_custom_call.1} parent=1 // pred_check_branch
      %78 = sbr.rel (0) target = $region41
    $region40: #{tpu_custom_call.1} parent=1 // pred_region
      _
    $region41: #{tpu_custom_call.1} parent=1 // pred_fallthru
      _
    // Predicated region
    $region42: #{tpu_custom_call.1} parent=1 // pred_check
      _
    $region43: #{tpu_custom_call.1} parent=1 // pred_check_branch
      %80 = sbr.rel (0) target = $region45
    $region44: #{tpu_custom_call.1} parent=1 // pred_region
      %82 = vsyncadd [#allocation9], 0
      %s84 = sshll.u32 %s10, 4
      %s85 = int_to_ptr.hbm [resolvable:$true] %s84
      %s86 = sshll.u32 [#allocation8], 4
      %s87 = int_to_ptr.vmem [resolvable:$true] %s86
      %89 = dma.hbm_to_vmem [thread:$0]  %s85, 16, %s87, [#allocation9]
    $region45: #{tpu_custom_call.1} parent=1 // pred_fallthru
      _
    // Predicated region
    $region46: #{tpu_custom_call.1} parent=1 // pred_check
      _
    $region47: #{tpu_custom_call.1} parent=1 // pred_check_branch
      %91 = sbr.rel (0) target = $region49
    $region48: #{tpu_custom_call.1} parent=1 // pred_region
      _
    $region49: #{tpu_custom_call.1} parent=1 // pred_fallthru
      _
    // Predicated region
    $region50: #{tpu_custom_call.1} parent=1 // pred_check
      _
    $region51: #{tpu_custom_call.1} parent=1 // pred_check_branch
      %93 = sbr.rel (0) target = $region53
    $region52: #{tpu_custom_call.1} parent=1 // pred_region
      _
    $region53: #{tpu_custom_call.1} parent=1 // pred_fallthru
      _
    // Predicated region
    $region54: #{tpu_custom_call.1} parent=1 // pred_check
      _
    $region55: #{tpu_custom_call.1} parent=1 // pred_check_branch
      %95 = sbr.rel (0) target = $region57
    $region56: #{tpu_custom_call.1} parent=1 // pred_region
      %97 = vsyncadd [#allocation9], 0
      %s98 = sshll.u32 %s13, 4
      %s99 = int_to_ptr.hbm [resolvable:$true] %s98
      %s100 = sshll.u32 [#allocation10], 4
      %s101 = int_to_ptr.vmem [resolvable:$true] %s100
      %106 = dma.hbm_to_vmem [thread:$0]  %s99, 128, %s101, [#allocation9], 64, 64, 4
    $region57: #{tpu_custom_call.1} parent=1 // pred_fallthru
      _
    // Predicated region
    $region58: #{tpu_custom_call.1} parent=1 // pred_check
      _
    $region59: #{tpu_custom_call.1} parent=1 // pred_check_branch
      %108 = sbr.rel (0) target = $region61
    $region60: #{tpu_custom_call.1} parent=1 // pred_region
      _
    $region61: #{tpu_custom_call.1} parent=1 // pred_fallthru
      _
    // Predicated region
    $region62: #{tpu_custom_call.1} parent=1 // pred_check
      _
    $region63: #{tpu_custom_call.1} parent=1 // pred_check_branch
      %110 = sbr.rel (0) target = $region65
    $region64: #{tpu_custom_call.1} parent=1 // pred_region
      %112 = vsyncadd [#allocation12], 0
      %s113 = sshll.u32 %s15, 4
      %s114 = int_to_ptr.hbm [resolvable:$true] %s113
      %s115 = sshll.u32 [#allocation11], 4
      %s116 = int_to_ptr.vmem [resolvable:$true] %s115
      %121 = dma.hbm_to_vmem [thread:$0]  %s114, 128, %s116, [#allocation12], 64, 64, 4
    $region65: #{tpu_custom_call.1} parent=1 // pred_fallthru
      _
    // Predicated region
    $region66: #{tpu_custom_call.1} parent=1 // pred_check
      _
    $region67: #{tpu_custom_call.1} parent=1 // pred_check_branch
      %123 = sbr.rel (0) target = $region69
    $region68: #{tpu_custom_call.1} parent=1 // pred_region
      _
    $region69: #{tpu_custom_call.1} parent=1 // pred_fallthru
      _
    // Predicated region
    $region70: #{tpu_custom_call.1} parent=1 // pred_check
      _
    $region71: #{tpu_custom_call.1} parent=1 // pred_check_branch
      %125 = sbr.rel (0) target = $region73
    $region72: #{tpu_custom_call.1} parent=1 // pred_region
      _
    $region73: #{tpu_custom_call.1} parent=1 // pred_fallthru
      _
    // Predicated region
    $region74: #{tpu_custom_call.1} parent=1 // pred_check
      _
    $region75: #{tpu_custom_call.1} parent=1 // pred_check_branch
      %127 = sbr.rel (0) target = $region77
    $region76: #{tpu_custom_call.1} parent=1 // pred_region
      %129 = dma.done [#allocation3], 128
    $region77: #{tpu_custom_call.1} parent=1 // pred_fallthru
      _
    // Predicated region
    $region78: #{tpu_custom_call.1} parent=1 // pred_check
      _
    $region79: #{tpu_custom_call.1} parent=1 // pred_check_branch
      %131 = sbr.rel (0) target = $region81
    $region80: #{tpu_custom_call.1} parent=1 // pred_region
      %133 = dma.done [#allocation6], 16
    $region81: #{tpu_custom_call.1} parent=1 // pred_fallthru
      _
    // Predicated region
    $region82: #{tpu_custom_call.1} parent=1 // pred_check
      _
    $region83: #{tpu_custom_call.1} parent=1 // pred_check_branch
      %135 = sbr.rel (0) target = $region85
    $region84: #{tpu_custom_call.1} parent=1 // pred_region
      %137 = dma.done [#allocation6], 128
    $region85: #{tpu_custom_call.1} parent=1 // pred_fallthru
      _
    // Predicated region
    $region86: #{tpu_custom_call.1} parent=1 // pred_check
      _
    $region87: #{tpu_custom_call.1} parent=1 // pred_check_branch
      %139 = sbr.rel (0) target = $region89
    $region88: #{tpu_custom_call.1} parent=1 // pred_region
      %141 = dma.done [#allocation9], 16
    $region89: #{tpu_custom_call.1} parent=1 // pred_fallthru
      _
    // Predicated region
    $region90: #{tpu_custom_call.1} parent=1 // pred_check
      _
    $region91: #{tpu_custom_call.1} parent=1 // pred_check_branch
      %143 = sbr.rel (0) target = $region93
    $region92: #{tpu_custom_call.1} parent=1 // pred_region
      %145 = dma.done [#allocation9], 128
    $region93: #{tpu_custom_call.1} parent=1 // pred_fallthru
      _
    // Predicated region
    $region94: #{tpu_custom_call.1} parent=1 // pred_check
      _
    $region95: #{tpu_custom_call.1} parent=1 // pred_check_branch
      %147 = sbr.rel (0) target = $region97
    $region96: #{tpu_custom_call.1} parent=1 // pred_region
      %149 = dma.done [#allocation12], 128
    $region97: #{tpu_custom_call.1} parent=1 // pred_fallthru
      _
    %v151 = vld [vmem:[%s1] sm:$0xff]
    %v152 = vld [vmem:[%s1 + $0x8] sm:$0xff]
    %v153 = vpack.c.bf16 %v152, %v151
    %v154 = vld [vmem:[%s0] sm:$0xff]
    %v155 = vld [vmem:[%s0 + $0x8] sm:$0xff]
    %v156 = vld [vmem:[%s0 + $0x10] sm:$0xff]
    %v157 = vld [vmem:[%s0 + $0x18] sm:$0xff]
    %vm158 = vcmask 64512
    %v159 = vsel %vm158, %v154, 0.0
    %160 = vadd.xlane.f32.xlu0 %v159
    %v161 = vpop.xlane.xlu0 %160
    %v162 = vsel %vm158, %v156, 0.0
    %163 = vadd.xlane.f32.xlu0 %v162
    %v164 = vpop.xlane.xlu0 %163
    %v165 = vadd.f32 %v161, 1.0
    %v166 = vadd.f32 %v164, 1.0
    %v167 = vrcp.pop %v165
    %v168 = vmul.f32 %v165, %v167
    %v169 = vsub.f32 1.0, %v168
    %v170 = vmul.f32 %v167, %v169
    %v171 = vadd.f32 %v167, %v170
    %vm172 = vweird.f32 %v165
    %vm173 = vweird.f32 %v167
    %vm174 = vmor %vm172, %vm173
    %v175 = vsel %vm174, %v167, %v171
    %v176 = vand.u32 2147483647, %v165
    %vm177 = vcmp.eq.f32.partialorder %v176, 8.507059e+37
    %v178 = vand.u32 %v165, 2147483648
    %v179 = vor.u32 1.1754944e-38, %v178
    %v180 = vsel %vm177, %v179, %v175
    %v181 = vrcp.pop %v166
    %v182 = vmul.f32 %v166, %v181
    %v183 = vsub.f32 1.0, %v182
    %v184 = vmul.f32 %v181, %v183
    %v185 = vadd.f32 %v181, %v184
    %vm186 = vweird.f32 %v166
    %vm187 = vweird.f32 %v181
    %vm188 = vmor %vm186, %vm187
    %v189 = vsel %vm188, %v181, %v185
    %v190 = vand.u32 2147483647, %v166
    %vm191 = vcmp.eq.f32.partialorder %v190, 8.507059e+37
    %v192 = vand.u32 %v166, 2147483648
    %v193 = vor.u32 1.1754944e-38, %v192
    %v194 = vsel %vm191, %v193, %v189
    %v195 = vpack.c.bf16 %v154, %v154
    %v196 = vpack.c.bf16 %v156, %v156
    %v197 = vld [vmem:[%s2] sm:$0xf]
    %v198 = vld [vmem:[%s2 + $0x4] sm:$0xf]
    %v199 = vld [vmem:[%s2 + $0x8] sm:$0xf]
    %v200 = vld [vmem:[%s2 + $0xc] sm:$0xf]
    %v205 = vunpack.c.l.b16 %v197
    %v206 = vunpack.c.l.b16 %v198
    %v207 = vunpack.c.l.b16 %v199
    %v208 = vunpack.c.l.b16 %v200
    %v209 = vpack.c.b16 %v206, %v205
    %v210 = vpack.c.b16 %v208, %v207
    %vm213 = vcmask 261120
    %v215 = vsel %vm213, %v153, 0
    %217 = vmatpush.bf16.msra.mxu0 0
    %218 = vmatpush.bf16.msra.mxu0 0
    %219 = vmatpush.bf16.msra.mxu0 0
    %220 = vmatpush.bf16.msra.mxu0 0
    %221 = vmatpush.bf16.msra.mxu0 0
    %222 = vmatpush.bf16.msra.mxu0 0
    %223 = vmatpush.bf16.msra.mxu0 %v210
    %224 = vmatpush.bf16.msra.mxu0 %v209
    %225 = vmatmul.bf16.gmra.mxu0 %v215
    %v226 = vpop.f32.mrf.mxu0
    %v227 = vadd.f32 0.0, %v226
    %v228 = vpop.f32.mrf.mxu0
    %v229 = vadd.f32 0.0, %v228
    %230 = vdwg.mxu0
    %v231 = vld [vmem:[%s3] sm:$0x1]
    %v232 = vpack.c.bf16 %v227, %v227
    %v233 = vpack.c.bf16 %v229, %v229
    %v235 = vsel %vm158, %v195, 0
    %vm237 = vcmask 1043456
    %v239 = vsel %vm237, %v232, 0
    %241 = vmatpush.bf16.msra.mxu0 0
    %242 = vmatpush.bf16.msra.mxu0 0
    %243 = vmatpush.bf16.msra.mxu0 0
    %244 = vmatpush.bf16.msra.mxu0 0
    %245 = vmatpush.bf16.msra.mxu0 0
    %246 = vmatpush.bf16.msra.mxu0 0
    %247 = vmatpush.bf16.msra.mxu0 0
    %248 = vmatpush.bf16.msra.mxu0 %v239
    %249 = vmatmul.bf16.gmra.mxu0 %v235
    %v250 = vpop.f32.mrf.mxu0
    %v251 = vadd.f32 %v227, %v250
    %v252 = vpop.f32.mrf.mxu0
    %253 = vdwg.mxu0
    %v255 = vsel %vm158, %v196, 0
    %v258 = vsel %vm237, %v233, 0
    %260 = vmatpush.bf16.msra.mxu0 0
    %261 = vmatpush.bf16.msra.mxu0 0
    %262 = vmatpush.bf16.msra.mxu0 0
    %263 = vmatpush.bf16.msra.mxu0 0
    %264 = vmatpush.bf16.msra.mxu0 0
    %265 = vmatpush.bf16.msra.mxu0 0
    %266 = vmatpush.bf16.msra.mxu0 0
    %267 = vmatpush.bf16.msra.mxu0 %v258
    %268 = vmatmul.bf16.gmra.mxu0 %v255
    %v269 = vpop.f32.mrf.mxu0
    %v270 = vadd.f32 %v229, %v269
    %v271 = vpop.f32.mrf.mxu0
    %272 = vdwg.mxu0
    %v274 = vperm.slane %v231, 0
    %v276 = vadd.f32 %v251, %v274
    %v277 = vadd.f32 %v270, %v274
    %v278 = vmul.f32 %v276, %v180
    %v279 = vmul.f32 %v277, %v194
    %v280 = vmax.f32 %v278, 0.0
    %v281 = vmax.f32 %v279, 0.0
    %v282 = vpack.c.bf16 %v281, %v280
    %v283 = vld [vmem:[%s4] sm:$0xf]
    %v284 = vld [vmem:[%s4 + $0x4] sm:$0xf]
    %v285 = vld [vmem:[%s5] sm:$0xf]
    %v286 = vld [vmem:[%s5 + $0x4] sm:$0xf]
    %v287 = vld [vmem:[%s5 + $0x8] sm:$0xf]
    %v288 = vld [vmem:[%s5 + $0xc] sm:$0xf]
    %v289 = vld [vmem:[#allocation2] sm:$0xf]
    %v290 = vld [vmem:[#allocation2 + $0x4] sm:$0xf]
    %v293 = vunpack.c.l.b16 %v289
    %v294 = vunpack.c.l.b16 %v290
    %v295 = vpack.c.b16 %v294, %v293
    %vm297 = vcmask 130048
    %v299 = vsel %vm297, %v282, 0
    %301 = vmatpush.bf16.msra.mxu0 0
    %302 = vmatpush.bf16.msra.mxu0 0
    %303 = vmatpush.bf16.msra.mxu0 0
    %304 = vmatpush.bf16.msra.mxu0 0
    %305 = vmatpush.bf16.msra.mxu0 0
    %306 = vmatpush.bf16.msra.mxu0 0
    %307 = vmatpush.bf16.msra.mxu0 0
    %308 = vmatpush.bf16.msra.mxu0 %v295
    %309 = vmatmul.bf16.gmra.mxu0 %v299
    %v310 = vpop.f32.mrf.mxu0
    %v311 = vadd.f32 0.0, %v310
    %v312 = vpop.f32.mrf.mxu0
    %v313 = vadd.f32 0.0, %v312
    %314 = vdwg.mxu0
    %v319 = vunpack.c.l.b16 %v285
    %v320 = vunpack.c.l.b16 %v286
    %v321 = vunpack.c.l.b16 %v287
    %v322 = vunpack.c.l.b16 %v288
    %v323 = vpack.c.b16 %v320, %v319
    %v324 = vpack.c.b16 %v322, %v321
    %327 = vmatpush.bf16.msra.mxu0 0
    %328 = vmatpush.bf16.msra.mxu0 0
    %329 = vmatpush.bf16.msra.mxu0 0
    %330 = vmatpush.bf16.msra.mxu0 0
    %331 = vmatpush.bf16.msra.mxu0 0
    %332 = vmatpush.bf16.msra.mxu0 0
    %333 = vmatpush.bf16.msra.mxu0 %v324
    %334 = vmatpush.bf16.msra.mxu0 %v323
    %335 = vmatmul.bf16.gmra.mxu0 %v215
    %v336 = vpop.f32.mrf.mxu0
    %v337 = vadd.f32 %v311, %v336
    %v338 = vpop.f32.mrf.mxu0
    %v339 = vadd.f32 %v313, %v338
    %340 = vdwg.mxu0
    %v341 = vld [vmem:[#allocation5] sm:$0x1]
    %v342 = vpack.c.bf16 %v337, %v337
    %v343 = vpack.c.bf16 %v339, %v339
    %v345 = vsel %vm237, %v342, 0
    %347 = vmatpush.bf16.msra.mxu0 0
    %348 = vmatpush.bf16.msra.mxu0 0
    %349 = vmatpush.bf16.msra.mxu0 0
    %350 = vmatpush.bf16.msra.mxu0 0
    %351 = vmatpush.bf16.msra.mxu0 0
    %352 = vmatpush.bf16.msra.mxu0 0
    %353 = vmatpush.bf16.msra.mxu0 0
    %354 = vmatpush.bf16.msra.mxu0 %v345
    %355 = vmatmul.bf16.gmra.mxu0 %v235
    %v356 = vpop.f32.mrf.mxu0
    %v357 = vadd.f32 %v337, %v356
    %v358 = vpop.f32.mrf.mxu0
    %359 = vdwg.mxu0
    %v361 = vsel %vm237, %v343, 0
    %363 = vmatpush.bf16.msra.mxu0 0
    %364 = vmatpush.bf16.msra.mxu0 0
    %365 = vmatpush.bf16.msra.mxu0 0
    %366 = vmatpush.bf16.msra.mxu0 0
    %367 = vmatpush.bf16.msra.mxu0 0
    %368 = vmatpush.bf16.msra.mxu0 0
    %369 = vmatpush.bf16.msra.mxu0 0
    %370 = vmatpush.bf16.msra.mxu0 %v361
    %371 = vmatmul.bf16.gmra.mxu0 %v255
    %v372 = vpop.f32.mrf.mxu0
    %v373 = vadd.f32 %v339, %v372
    %v374 = vpop.f32.mrf.mxu0
    %375 = vdwg.mxu0
    %v377 = vperm.slane %v341, 0
    %v379 = vadd.f32 %v357, %v377
    %v380 = vadd.f32 %v373, %v377
    %v381 = vmul.f32 %v379, %v180
    %v382 = vmul.f32 %v380, %v194
    %v383 = vmax.f32 %v381, 0.0
    %v384 = vmax.f32 %v382, 0.0
    %v385 = vpack.c.bf16 %v384, %v383
    %v386 = vld [vmem:[#allocation7] sm:$0xf]
    %v387 = vld [vmem:[#allocation7 + $0x4] sm:$0xf]
    %v390 = vunpack.c.l.b16 %v386
    %v391 = vunpack.c.l.b16 %v387
    %v392 = vpack.c.b16 %v391, %v390
    %v395 = vsel %vm297, %v385, 0
    %397 = vmatpush.bf16.msra.mxu0 0
    %398 = vmatpush.bf16.msra.mxu0 0
    %399 = vmatpush.bf16.msra.mxu0 0
    %400 = vmatpush.bf16.msra.mxu0 0
    %401 = vmatpush.bf16.msra.mxu0 0
    %402 = vmatpush.bf16.msra.mxu0 0
    %403 = vmatpush.bf16.msra.mxu0 0
    %404 = vmatpush.bf16.msra.mxu0 %v392
    %405 = vmatmul.bf16.gmra.mxu0 %v395
    %v406 = vpop.f32.mrf.mxu0
    %v407 = vadd.f32 0.0, %v406
    %v408 = vpop.f32.mrf.mxu0
    %v409 = vadd.f32 0.0, %v408
    %410 = vdwg.mxu0
    %v413 = vunpack.c.l.b16 %v283
    %v414 = vunpack.c.l.b16 %v284
    %v415 = vpack.c.b16 %v414, %v413
    %417 = vmatpush.bf16.msra.mxu0 0
    %418 = vmatpush.bf16.msra.mxu0 0
    %419 = vmatpush.bf16.msra.mxu0 0
    %420 = vmatpush.bf16.msra.mxu0 0
    %421 = vmatpush.bf16.msra.mxu0 0
    %422 = vmatpush.bf16.msra.mxu0 0
    %423 = vmatpush.bf16.msra.mxu0 0
    %424 = vmatpush.bf16.msra.mxu0 %v415
    %425 = vmatmul.bf16.gmra.mxu0 %v299
    %v426 = vpop.f32.mrf.mxu0
    %v427 = vadd.f32 %v407, %v426
    %v428 = vpop.f32.mrf.mxu0
    %v429 = vadd.f32 %v409, %v428
    %430 = vdwg.mxu0
    %v431 = vsel %vm158, %v155, 0.0
    %432 = vadd.xlane.f32.xlu0 %v431
    %v433 = vpop.xlane.xlu0 %432
    %v434 = vsel %vm158, %v157, 0.0
    %435 = vadd.xlane.f32.xlu0 %v434
    %v436 = vpop.xlane.xlu0 %435
    %v437 = vadd.f32 %v433, 1.0
    %v438 = vadd.f32 %v436, 1.0
    %v439 = vrcp.pop %v437
    %v440 = vmul.f32 %v437, %v439
    %v441 = vsub.f32 1.0, %v440
    %v442 = vmul.f32 %v439, %v441
    %v443 = vadd.f32 %v439, %v442
    %vm444 = vweird.f32 %v437
    %vm445 = vweird.f32 %v439
    %vm446 = vmor %vm444, %vm445
    %v447 = vsel %vm446, %v439, %v443
    %v448 = vand.u32 2147483647, %v437
    %vm449 = vcmp.eq.f32.partialorder %v448, 8.507059e+37
    %v450 = vand.u32 %v437, 2147483648
    %v451 = vor.u32 1.1754944e-38, %v450
    %v452 = vsel %vm449, %v451, %v447
    %v453 = vrcp.pop %v438
    %v454 = vmul.f32 %v438, %v453
    %v455 = vsub.f32 1.0, %v454
    %v456 = vmul.f32 %v453, %v455
    %v457 = vadd.f32 %v453, %v456
    %vm458 = vweird.f32 %v438
    %vm459 = vweird.f32 %v453
    %vm460 = vmor %vm458, %vm459
    %v461 = vsel %vm460, %v453, %v457
    %v462 = vand.u32 2147483647, %v438
    %vm463 = vcmp.eq.f32.partialorder %v462, 8.507059e+37
    %v464 = vand.u32 %v438, 2147483648
    %v465 = vor.u32 1.1754944e-38, %v464
    %v466 = vsel %vm463, %v465, %v461
    %v467 = vpack.c.bf16 %v155, %v155
    %v468 = vpack.c.bf16 %v157, %v157
    %v469 = vld [vmem:[%s9] sm:$0xf]
    %v470 = vld [vmem:[%s9 + $0x4] sm:$0xf]
    %v471 = vld [vmem:[%s9 + $0x8] sm:$0xf]
    %v472 = vld [vmem:[%s9 + $0xc] sm:$0xf]
    %v477 = vunpack.c.l.b16 %v469
    %v478 = vunpack.c.l.b16 %v470
    %v479 = vunpack.c.l.b16 %v471
    %v480 = vunpack.c.l.b16 %v472
    %v481 = vpack.c.b16 %v478, %v477
    %v482 = vpack.c.b16 %v480, %v479
    %485 = vmatpush.bf16.msra.mxu0 0
    %486 = vmatpush.bf16.msra.mxu0 0
    %487 = vmatpush.bf16.msra.mxu0 0
    %488 = vmatpush.bf16.msra.mxu0 0
    %489 = vmatpush.bf16.msra.mxu0 0
    %490 = vmatpush.bf16.msra.mxu0 0
    %491 = vmatpush.bf16.msra.mxu0 %v482
    %492 = vmatpush.bf16.msra.mxu0 %v481
    %493 = vmatmul.bf16.gmra.mxu0 %v215
    %v494 = vpop.f32.mrf.mxu0
    %v495 = vadd.f32 0.0, %v494
    %v496 = vpop.f32.mrf.mxu0
    %v497 = vadd.f32 0.0, %v496
    %498 = vdwg.mxu0
    %v499 = vld [vmem:[#allocation8] sm:$0x1]
    %v500 = vpack.c.bf16 %v495, %v495
    %v501 = vpack.c.bf16 %v497, %v497
    %v503 = vsel %vm158, %v467, 0
    %v506 = vsel %vm237, %v500, 0
    %508 = vmatpush.bf16.msra.mxu0 0
    %509 = vmatpush.bf16.msra.mxu0 0
    %510 = vmatpush.bf16.msra.mxu0 0
    %511 = vmatpush.bf16.msra.mxu0 0
    %512 = vmatpush.bf16.msra.mxu0 0
    %513 = vmatpush.bf16.msra.mxu0 0
    %514 = vmatpush.bf16.msra.mxu0 0
    %515 = vmatpush.bf16.msra.mxu0 %v506
    %516 = vmatmul.bf16.gmra.mxu0 %v503
    %v517 = vpop.f32.mrf.mxu0
    %v518 = vadd.f32 %v495, %v517
    %v519 = vpop.f32.mrf.mxu0
    %520 = vdwg.mxu0
    %v522 = vsel %vm158, %v468, 0
    %v525 = vsel %vm237, %v501, 0
    %527 = vmatpush.bf16.msra.mxu0 0
    %528 = vmatpush.bf16.msra.mxu0 0
    %529 = vmatpush.bf16.msra.mxu0 0
    %530 = vmatpush.bf16.msra.mxu0 0
    %531 = vmatpush.bf16.msra.mxu0 0
    %532 = vmatpush.bf16.msra.mxu0 0
    %533 = vmatpush.bf16.msra.mxu0 0
    %534 = vmatpush.bf16.msra.mxu0 %v525
    %535 = vmatmul.bf16.gmra.mxu0 %v522
    %v536 = vpop.f32.mrf.mxu0
    %v537 = vadd.f32 %v497, %v536
    %v538 = vpop.f32.mrf.mxu0
    %539 = vdwg.mxu0
    %v541 = vperm.slane %v499, 0
    %v543 = vadd.f32 %v518, %v541
    %v544 = vadd.f32 %v537, %v541
    %v545 = vmul.f32 %v543, %v452
    %v546 = vmul.f32 %v544, %v466
    %v547 = vmax.f32 %v545, 0.0
    %v548 = vmax.f32 %v546, 0.0
    %v549 = vpack.c.bf16 %v548, %v547
    %v550 = vld [vmem:[%s11] sm:$0xf]
    %v551 = vld [vmem:[%s11 + $0x4] sm:$0xf]
    %v554 = vunpack.c.l.b16 %v550
    %v555 = vunpack.c.l.b16 %v551
    %v556 = vpack.c.b16 %v555, %v554
    %v559 = vsel %vm297, %v549, 0
    %561 = vmatpush.bf16.msra.mxu0 0
    %562 = vmatpush.bf16.msra.mxu0 0
    %563 = vmatpush.bf16.msra.mxu0 0
    %564 = vmatpush.bf16.msra.mxu0 0
    %565 = vmatpush.bf16.msra.mxu0 0
    %566 = vmatpush.bf16.msra.mxu0 0
    %567 = vmatpush.bf16.msra.mxu0 0
    %568 = vmatpush.bf16.msra.mxu0 %v556
    %569 = vmatmul.bf16.gmra.mxu0 %v559
    %v570 = vpop.f32.mrf.mxu0
    %v571 = vadd.f32 0.0, %v570
    %v572 = vpop.f32.mrf.mxu0
    %v573 = vadd.f32 0.0, %v572
    %574 = vdwg.mxu0
    %v575 = vadd.f32 %v427, %v571
    %v576 = vadd.f32 %v429, %v573
    %v577 = vld [vmem:[%s12] sm:$0xf]
    %v578 = vld [vmem:[%s12 + $0x4] sm:$0xf]
    %v579 = vld [vmem:[%s12 + $0x8] sm:$0xf]
    %v580 = vld [vmem:[%s12 + $0xc] sm:$0xf]
    %v581 = vld [vmem:[#allocation10] sm:$0xf]
    %v582 = vld [vmem:[#allocation10 + $0x4] sm:$0xf]
    %v585 = vunpack.c.l.b16 %v581
    %v586 = vunpack.c.l.b16 %v582
    %v587 = vpack.c.b16 %v586, %v585
    %589 = vmatpush.bf16.msra.mxu0 0
    %590 = vmatpush.bf16.msra.mxu0 0
    %591 = vmatpush.bf16.msra.mxu0 0
    %592 = vmatpush.bf16.msra.mxu0 0
    %593 = vmatpush.bf16.msra.mxu0 0
    %594 = vmatpush.bf16.msra.mxu0 0
    %595 = vmatpush.bf16.msra.mxu0 0
    %596 = vmatpush.bf16.msra.mxu0 %v587
    %597 = vmatmul.bf16.gmra.mxu0 %v559
    %v598 = vpop.f32.mrf.mxu0
    %v599 = vadd.f32 0.0, %v598
    %v600 = vpop.f32.mrf.mxu0
    %v601 = vadd.f32 0.0, %v600
    %602 = vdwg.mxu0
    %v607 = vunpack.c.l.b16 %v577
    %v608 = vunpack.c.l.b16 %v578
    %v609 = vunpack.c.l.b16 %v579
    %v610 = vunpack.c.l.b16 %v580
    %v611 = vpack.c.b16 %v608, %v607
    %v612 = vpack.c.b16 %v610, %v609
    %615 = vmatpush.bf16.msra.mxu0 0
    %616 = vmatpush.bf16.msra.mxu0 0
    %617 = vmatpush.bf16.msra.mxu0 0
    %618 = vmatpush.bf16.msra.mxu0 0
    %619 = vmatpush.bf16.msra.mxu0 0
    %620 = vmatpush.bf16.msra.mxu0 0
    %621 = vmatpush.bf16.msra.mxu0 %v612
    %622 = vmatpush.bf16.msra.mxu0 %v611
    %623 = vmatmul.bf16.gmra.mxu0 %v215
    %v624 = vpop.f32.mrf.mxu0
    %v625 = vadd.f32 %v599, %v624
    %v626 = vpop.f32.mrf.mxu0
    %v627 = vadd.f32 %v601, %v626
    %628 = vdwg.mxu0
    %v629 = vld [vmem:[%s14] sm:$0x1]
    %v630 = vpack.c.bf16 %v625, %v625
    %v631 = vpack.c.bf16 %v627, %v627
    %v633 = vsel %vm237, %v630, 0
    %635 = vmatpush.bf16.msra.mxu0 0
    %636 = vmatpush.bf16.msra.mxu0 0
    %637 = vmatpush.bf16.msra.mxu0 0
    %638 = vmatpush.bf16.msra.mxu0 0
    %639 = vmatpush.bf16.msra.mxu0 0
    %640 = vmatpush.bf16.msra.mxu0 0
    %641 = vmatpush.bf16.msra.mxu0 0
    %642 = vmatpush.bf16.msra.mxu0 %v633
    %643 = vmatmul.bf16.gmra.mxu0 %v503
    %v644 = vpop.f32.mrf.mxu0
    %v645 = vadd.f32 %v625, %v644
    %v646 = vpop.f32.mrf.mxu0
    %647 = vdwg.mxu0
    %v649 = vsel %vm237, %v631, 0
    %651 = vmatpush.bf16.msra.mxu0 0
    %652 = vmatpush.bf16.msra.mxu0 0
    %653 = vmatpush.bf16.msra.mxu0 0
    %654 = vmatpush.bf16.msra.mxu0 0
    %655 = vmatpush.bf16.msra.mxu0 0
    %656 = vmatpush.bf16.msra.mxu0 0
    %657 = vmatpush.bf16.msra.mxu0 0
    %658 = vmatpush.bf16.msra.mxu0 %v649
    %659 = vmatmul.bf16.gmra.mxu0 %v522
    %v660 = vpop.f32.mrf.mxu0
    %v661 = vadd.f32 %v627, %v660
    %v662 = vpop.f32.mrf.mxu0
    %663 = vdwg.mxu0
    %v665 = vperm.slane %v629, 0
    %v667 = vadd.f32 %v645, %v665
    %v668 = vadd.f32 %v661, %v665
    %v669 = vmul.f32 %v667, %v452
    %v670 = vmul.f32 %v668, %v466
    %v671 = vmax.f32 %v669, 0.0
    %v672 = vmax.f32 %v670, 0.0
    %v673 = vpack.c.bf16 %v672, %v671
    %v674 = vld [vmem:[#allocation11] sm:$0xf]
    %v675 = vld [vmem:[#allocation11 + $0x4] sm:$0xf]
    %v678 = vunpack.c.l.b16 %v674
    %v679 = vunpack.c.l.b16 %v675
    %v680 = vpack.c.b16 %v679, %v678
    %v683 = vsel %vm297, %v673, 0
    %685 = vmatpush.bf16.msra.mxu0 0
    %686 = vmatpush.bf16.msra.mxu0 0
    %687 = vmatpush.bf16.msra.mxu0 0
    %688 = vmatpush.bf16.msra.mxu0 0
    %689 = vmatpush.bf16.msra.mxu0 0
    %690 = vmatpush.bf16.msra.mxu0 0
    %691 = vmatpush.bf16.msra.mxu0 0
    %692 = vmatpush.bf16.msra.mxu0 %v680
    %693 = vmatmul.bf16.gmra.mxu0 %v683
    %v694 = vpop.f32.mrf.mxu0
    %v695 = vadd.f32 0.0, %v694
    %v696 = vpop.f32.mrf.mxu0
    %v697 = vadd.f32 0.0, %v696
    %698 = vdwg.mxu0
    %v699 = vadd.f32 %v575, %v695
    %v700 = vadd.f32 %v576, %v697
    %v701 = vld [vmem:[%s16] sm:$0xf]
    %v702 = vld [vmem:[%s16 + $0x4] sm:$0xf]
    %v703 = vld [vmem:[%s16 + $0x8] sm:$0xf]
    %v704 = vld [vmem:[%s16 + $0xc] sm:$0xf]
    %v705 = vld [vmem:[%s17] sm:$0x1]
    %v710 = vunpack.c.l.b16 %v701
    %v711 = vunpack.c.l.b16 %v702
    %v712 = vunpack.c.l.b16 %v703
    %v713 = vunpack.c.l.b16 %v704
    %v714 = vpack.c.b16 %v711, %v710
    %v715 = vpack.c.b16 %v713, %v712
    %718 = vmatpush.bf16.msra.mxu0 0
    %719 = vmatpush.bf16.msra.mxu0 0
    %720 = vmatpush.bf16.msra.mxu0 0
    %721 = vmatpush.bf16.msra.mxu0 0
    %722 = vmatpush.bf16.msra.mxu0 0
    %723 = vmatpush.bf16.msra.mxu0 0
    %724 = vmatpush.bf16.msra.mxu0 %v715
    %725 = vmatpush.bf16.msra.mxu0 %v714
    %726 = vmatmul.bf16.gmra.mxu0 %v215
    %v727 = vpop.f32.mrf.mxu0
    %v728 = vadd.f32 0.0, %v727
    %v729 = vpop.f32.mrf.mxu0
    %v730 = vadd.f32 0.0, %v729
    %731 = vdwg.mxu0
    %v732 = vadd.f32 %v699, %v728
    %v733 = vadd.f32 %v700, %v730
    %v735 = vperm.slane %v705, 0
    %v737 = vadd.f32 %v732, %v735
    %v738 = vadd.f32 %v733, %v735
    %739 = vst.msk [vmem:[#allocation13] sm:$0xff] %vm213, %v737
    %740 = vst.msk [vmem:[#allocation13 + $0x8] sm:$0xff] %vm213, %v738
    // Predicated region
    $region98: #{tpu_custom_call.1} parent=1 // pred_check
      _
    $region99: #{tpu_custom_call.1} parent=1 // pred_check_branch
      %742 = sbr.rel (0) target = $region101
    $region100: #{tpu_custom_call.1} parent=1 // pred_region
      %744 = vsyncadd [#allocation4], 0
      %s745 = sshll.u32 [#allocation13], 4
      %s746 = int_to_ptr.vmem [resolvable:$true] %s745
      %s747 = sshll.u32 %s18, 4
      %s748 = int_to_ptr.hbm [resolvable:$true] %s747
      %753 = dma.vmem_to_hbm [thread:$0]  %s746, 256, %s748, [#allocation4], 128, 128, 8
    $region101: #{tpu_custom_call.1} parent=1 // pred_fallthru
      _
    // Predicated region
    $region102: #{tpu_custom_call.1} parent=1 // pred_check
      _
    $region103: #{tpu_custom_call.1} parent=1 // pred_check_branch
      %755 = sbr.rel (0) target = $region105
    $region104: #{tpu_custom_call.1} parent=1 // pred_region
      %757 = dma.done [#allocation4], 256
    $region105: #{tpu_custom_call.1} parent=1 // pred_fallthru
      _
    %758 = vsyncpa [#allocation3], 1
    %759 = vsyncpa [#allocation6], 1
    %760 = vsyncpa [#allocation9], 1
    %761 = vsyncpa [#allocation12], 1
    %762 = vsyncpa [#allocation4], 1

</llo_original>
